<compile_context>
chip_gen: v7x
topology: tpu7x:2x2x1
jax: 0.10.0
libtpu: 0.0.40
codegen_flags: <defaults>
</compile_context>

<pallas_src>
import jax
import jax.numpy as jnp
from jax.experimental import pallas as pl
from jax.experimental.pallas import tpu as pltpu


def bottleneck_kernel(x_ref, w1_ref, b1_ref, w2_ref, b2_ref, w3_ref, b3_ref, o_ref):
    # Layer 1: Linear (bf16 operands, f32 accum) + bias + ReLU. Dropout == identity (eval).
    h1 = jnp.dot(x_ref[...], w1_ref[...], preferred_element_type=jnp.float32)
    h1 = jnp.maximum(h1 + b1_ref[...], 0.0)
    # Layer 2: Linear + bias + ReLU. Dropout == identity (eval).
    h2 = jnp.dot(h1.astype(w2_ref.dtype), w2_ref[...], preferred_element_type=jnp.float32)
    h2 = jnp.maximum(h2 + b2_ref[...], 0.0)
    # Layer 3: Linear + bias (no activation).
    h3 = jnp.dot(h2.astype(w3_ref.dtype), w3_ref[...], preferred_element_type=jnp.float32)
    o_ref[...] = (h3 + b3_ref[...]).astype(o_ref.dtype)


def _make_call(out_dtype, Bp, F, H, D, block_b, cost, single_buffer_weights):
    """Build the pallas_call. Weight blocks are grid-invariant; optionally single-buffer them."""
    if single_buffer_weights:
        def wspec(shape):
            return pl.BlockSpec(shape, lambda i: (0, 0), pipeline_mode=pl.Buffered(1))
    else:
        def wspec(shape):
            return pl.BlockSpec(shape, lambda i: (0, 0))

    def bspec(shape):
        return pl.BlockSpec(shape, lambda i: (0, 0))

    return pl.pallas_call(
        bottleneck_kernel,
        out_shape=jax.ShapeDtypeStruct((Bp, D), out_dtype),
        grid_spec=pltpu.PrefetchScalarGridSpec(
            num_scalar_prefetch=0,
            grid=(Bp // block_b,),
            in_specs=[
                pl.BlockSpec((block_b, F), lambda i: (i, 0)),  # x batch tile
                wspec((F, H)),                                 # w1 (resident)
                bspec((1, H)),                                 # b1
                wspec((H, H)),                                 # w2 (resident)
                bspec((1, H)),                                 # b2
                wspec((H, D)),                                 # w3 (resident)
                bspec((1, D)),                                 # b3
            ],
            out_specs=pl.BlockSpec((block_b, D), lambda i: (i, 0)),
        ),
        compiler_params=pltpu.CompilerParams(
            dimension_semantics=("parallel",),
            vmem_limit_bytes=64 * 1024 * 1024,
        ),
        cost_estimate=cost,
    )


def bottleneck_forward(x, params, *, block_b=None):
    """x: (B, feature_dim) f32. params: (in,out) weights and (1,out) biases (f32)."""
    B, F = x.shape
    w1 = params["w1"].astype(jnp.bfloat16)
    w2 = params["w2"].astype(jnp.bfloat16)
    w3 = params["w3"].astype(jnp.bfloat16)
    b1 = params["b1"].astype(jnp.float32)
    b2 = params["b2"].astype(jnp.float32)
    b3 = params["b3"].astype(jnp.float32)
    H = w1.shape[1]
    D = w3.shape[1]

    # Batch tile: whole batch in one pass when small, MXU-sized tiles otherwise.
    if block_b is None:
        block_b = B if B <= 256 else 256
    Bp = pl.cdiv(B, block_b) * block_b

    xb = x.astype(jnp.bfloat16)
    if Bp != B:
        xb = jnp.pad(xb, ((0, Bp - B), (0, 0)))

    flops = 2 * Bp * (F * H + H * H + H * D)
    bytes_accessed = (
        xb.size * 2
        + (w1.size + w2.size + w3.size) * 2
        + (b1.size + b2.size + b3.size) * 4
        + Bp * D * 4
    )
    cost = pl.CostEstimate(flops=flops, transcendentals=0, bytes_accessed=bytes_accessed)

    args = (xb, w1, b1, w2, b2, w3, b3)
    try:
        out = _make_call(x.dtype, Bp, F, H, D, block_b, cost, True)(*args)
        out = jax.block_until_ready(out)
    except Exception:
        # Fallback if this Pallas build rejects single-buffered (Buffered(1)) blocks.
        out = _make_call(x.dtype, Bp, F, H, D, block_b, cost, False)(*args)
        out = jax.block_until_ready(out)

    return out[:B] if Bp != B else out


def init_params(key, feature_dim, bottleneck_dim, dtype=jnp.float32):
    """Init matching the PyTorch module (weights stored as (in_dim, out_dim))."""
    hidden = feature_dim // 2
    k1, k2, k3 = jax.random.split(key, 3)
    return {
        "w1": 0.01 * jax.random.normal(k1, (feature_dim, hidden), dtype),
        "b1": jnp.zeros((1, hidden), dtype),
        "w2": 0.01 * jax.random.normal(k2, (hidden, hidden), dtype),
        "b2": jnp.zeros((1, hidden), dtype),
        "w3": 0.3 * jax.random.normal(k3, (hidden, bottleneck_dim), dtype),
        "b3": jnp.zeros((1, bottleneck_dim), dtype),
    }


def reference_forward(x, params):
    """f32 reference using the same bf16-rounded operands as the kernel."""
    hp = jax.lax.Precision.HIGHEST
    bf = lambda a: a.astype(jnp.bfloat16).astype(jnp.float32)
    h1 = jnp.maximum(jnp.dot(bf(x), bf(params["w1"]), precision=hp) + params["b1"], 0.0)
    h2 = jnp.maximum(jnp.dot(bf(h1), bf(params["w2"]), precision=hp) + params["b2"], 0.0)
    return jnp.dot(bf(h2), bf(params["w3"]), precision=hp) + params["b3"]


if __name__ == "__main__":
    # Small shapes consistent with the module: feature_dim -> feature_dim//2 -> bottleneck_dim.
    B, FEATURE_DIM, BOTTLENECK_DIM = 16, 256, 128

    key = jax.random.PRNGKey(0)
    kx, kp = jax.random.split(key)
    x = jax.random.normal(kx, (B, FEATURE_DIM), jnp.float32)
    params = init_params(kp, FEATURE_DIM, BOTTLENECK_DIM)

    out = bottleneck_forward(x, params)
    out = jax.block_until_ready(out)

    ref = reference_forward(x, params)
    assert out.shape == (B, BOTTLENECK_DIM), out.shape
    assert jnp.allclose(out, ref, atol=3e-3, rtol=3e-3), (
        "mismatch vs reference: max abs diff = %s" % float(jnp.max(jnp.abs(out - ref)))
    )

    print("KERNEL_OK")
</pallas_src>

<mosaic_0001>
module attributes {stable_mosaic.version = 11 : i64} {
  func.func @bottleneck_kernel(%arg0: i32, %arg1: memref<16x256xbf16, #tpu.memory_space<vmem>>, %arg2: memref<256x128xbf16, #tpu.memory_space<vmem>>, %arg3: memref<1x128xf32, #tpu.memory_space<vmem>>, %arg4: memref<128x128xbf16, #tpu.memory_space<vmem>>, %arg5: memref<1x128xf32, #tpu.memory_space<vmem>>, %arg6: memref<128x128xbf16, #tpu.memory_space<vmem>>, %arg7: memref<1x128xf32, #tpu.memory_space<vmem>>, %arg8: memref<16x128xf32, #tpu.memory_space<vmem>>) attributes {dimension_semantics = [#tpu.dimension_semantics<parallel>], iteration_bounds = array<i64: 1>, scalar_prefetch = 0 : i64, scratch_operands = 0 : i64, tpu.core_type = #tpu.core_type<tc>, window_params = [{transform_indices = @transform_0, window_bounds = array<i64: 16, 256>}, {pipeline_mode = #tpu.pipeline_mode<synchronous>, transform_indices = @transform_1, window_bounds = array<i64: 256, 128>}, {pipeline_mode = #tpu.pipeline_mode<synchronous>, transform_indices = @transform_2, window_bounds = array<i64: 1, 128>}, {pipeline_mode = #tpu.pipeline_mode<synchronous>, transform_indices = @transform_3, window_bounds = array<i64: 128, 128>}, {pipeline_mode = #tpu.pipeline_mode<synchronous>, transform_indices = @transform_4, window_bounds = array<i64: 1, 128>}, {pipeline_mode = #tpu.pipeline_mode<synchronous>, transform_indices = @transform_5, window_bounds = array<i64: 128, 128>}, {pipeline_mode = #tpu.pipeline_mode<synchronous>, transform_indices = @transform_6, window_bounds = array<i64: 1, 128>}, {transform_indices = @transform_7, window_bounds = array<i64: 16, 128>}]} {
    %c0 = arith.constant 0 : index
    %c0_0 = arith.constant 0 : index
    %0 = vector.load %arg1[%c0, %c0_0] : memref<16x256xbf16, #tpu.memory_space<vmem>>, vector<16x256xbf16>
    %c0_1 = arith.constant 0 : index
    %c0_2 = arith.constant 0 : index
    %1 = vector.load %arg2[%c0_1, %c0_2] : memref<256x128xbf16, #tpu.memory_space<vmem>>, vector<256x128xbf16>
    %cst = arith.constant dense<0.000000e+00> : vector<16x128xf32>
    %2 = tpu.matmul %0, %1, %cst {dimension_numbers = #tpu.dot_dimension_numbers<[1], [0], [0], [1], [0, 0, 1, 1], [], []>} : vector<16x256xbf16>, vector<256x128xbf16>, vector<16x128xf32> -> vector<16x128xf32>
    %c0_3 = arith.constant 0 : index
    %c0_4 = arith.constant 0 : index
    %3 = vector.load %arg3[%c0_3, %c0_4] : memref<1x128xf32, #tpu.memory_space<vmem>>, vector<1x128xf32>
    %4 = vector.broadcast %3 : vector<1x128xf32> to vector<16x128xf32>
    %5 = arith.addf %2, %4 : vector<16x128xf32>
    %cst_5 = arith.constant 0.000000e+00 : f32
    %6 = vector.broadcast %cst_5 : f32 to vector<16x128xf32>
    %7 = arith.maximumf %5, %6 : vector<16x128xf32>
    %8 = arith.truncf %7 : vector<16x128xf32> to vector<16x128xbf16>
    %c0_6 = arith.constant 0 : index
    %c0_7 = arith.constant 0 : index
    %9 = vector.load %arg4[%c0_6, %c0_7] : memref<128x128xbf16, #tpu.memory_space<vmem>>, vector<128x128xbf16>
    %cst_8 = arith.constant dense<0.000000e+00> : vector<16x128xf32>
    %10 = tpu.matmul %8, %9, %cst_8 {dimension_numbers = #tpu.dot_dimension_numbers<[1], [0], [0], [1], [0, 0, 1, 1], [], []>} : vector<16x128xbf16>, vector<128x128xbf16>, vector<16x128xf32> -> vector<16x128xf32>
    %c0_9 = arith.constant 0 : index
    %c0_10 = arith.constant 0 : index
    %11 = vector.load %arg5[%c0_9, %c0_10] : memref<1x128xf32, #tpu.memory_space<vmem>>, vector<1x128xf32>
    %12 = vector.broadcast %11 : vector<1x128xf32> to vector<16x128xf32>
    %13 = arith.addf %10, %12 : vector<16x128xf32>
    %cst_11 = arith.constant 0.000000e+00 : f32
    %14 = vector.broadcast %cst_11 : f32 to vector<16x128xf32>
    %15 = arith.maximumf %13, %14 : vector<16x128xf32>
    %16 = arith.truncf %15 : vector<16x128xf32> to vector<16x128xbf16>
    %c0_12 = arith.constant 0 : index
    %c0_13 = arith.constant 0 : index
    %17 = vector.load %arg6[%c0_12, %c0_13] : memref<128x128xbf16, #tpu.memory_space<vmem>>, vector<128x128xbf16>
    %cst_14 = arith.constant dense<0.000000e+00> : vector<16x128xf32>
    %18 = tpu.matmul %16, %17, %cst_14 {dimension_numbers = #tpu.dot_dimension_numbers<[1], [0], [0], [1], [0, 0, 1, 1], [], []>} : vector<16x128xbf16>, vector<128x128xbf16>, vector<16x128xf32> -> vector<16x128xf32>
    %c0_15 = arith.constant 0 : index
    %c0_16 = arith.constant 0 : index
    %19 = vector.load %arg7[%c0_15, %c0_16] : memref<1x128xf32, #tpu.memory_space<vmem>>, vector<1x128xf32>
    %20 = vector.broadcast %19 : vector<1x128xf32> to vector<16x128xf32>
    %21 = arith.addf %18, %20 : vector<16x128xf32>
    %c0_17 = arith.constant 0 : index
    %c0_18 = arith.constant 0 : index
    %22 = vector.load %arg8[%c0_17, %c0_18] : memref<16x128xf32, #tpu.memory_space<vmem>>, vector<16x128xf32>
    tpu.vector_store %arg8[%c0_17, %c0_18], %21 {strides = array<i32>} : memref<16x128xf32, #tpu.memory_space<vmem>>, vector<16x128xf32>,
    return
  }
  func.func @transform_0(%arg0: i32) -> (i32, i32) {
    %c0_i32 = arith.constant 0 : i32
    %c0_i32_0 = arith.constant 0 : i32
    return %arg0, %c0_i32 : i32, i32
  }
  func.func @transform_1(%arg0: i32) -> (i32, i32) {
    %c0_i32 = arith.constant 0 : i32
    %c0_i32_0 = arith.constant 0 : i32
    %c0_i32_1 = arith.constant 0 : i32
    return %c0_i32, %c0_i32_0 : i32, i32
  }
  func.func @transform_2(%arg0: i32) -> (i32, i32) {
    %c0_i32 = arith.constant 0 : i32
    %c0_i32_0 = arith.constant 0 : i32
    %c0_i32_1 = arith.constant 0 : i32
    return %c0_i32, %c0_i32_0 : i32, i32
  }
  func.func @transform_3(%arg0: i32) -> (i32, i32) {
    %c0_i32 = arith.constant 0 : i32
    %c0_i32_0 = arith.constant 0 : i32
    %c0_i32_1 = arith.constant 0 : i32
    return %c0_i32, %c0_i32_0 : i32, i32
  }
  func.func @transform_4(%arg0: i32) -> (i32, i32) {
    %c0_i32 = arith.constant 0 : i32
    %c0_i32_0 = arith.constant 0 : i32
    %c0_i32_1 = arith.constant 0 : i32
    return %c0_i32, %c0_i32_0 : i32, i32
  }
  func.func @transform_5(%arg0: i32) -> (i32, i32) {
    %c0_i32 = arith.constant 0 : i32
    %c0_i32_0 = arith.constant 0 : i32
    %c0_i32_1 = arith.constant 0 : i32
    return %c0_i32, %c0_i32_0 : i32, i32
  }
  func.func @transform_6(%arg0: i32) -> (i32, i32) {
    %c0_i32 = arith.constant 0 : i32
    %c0_i32_0 = arith.constant 0 : i32
    %c0_i32_1 = arith.constant 0 : i32
    return %c0_i32, %c0_i32_0 : i32, i32
  }
  func.func @transform_7(%arg0: i32) -> (i32, i32) {
    %c0_i32 = arith.constant 0 : i32
    %c0_i32_0 = arith.constant 0 : i32
    return %arg0, %c0_i32 : i32, i32
  }
}

module attributes {stable_mosaic.version = 11 : i64} {
  func.func @bottleneck_kernel(%arg0: i32, %arg1: memref<16x256xbf16, #tpu.memory_space<vmem>>, %arg2: memref<256x128xbf16, #tpu.memory_space<vmem>>, %arg3: memref<1x128xf32, #tpu.memory_space<vmem>>, %arg4: memref<128x128xbf16, #tpu.memory_space<vmem>>, %arg5: memref<1x128xf32, #tpu.memory_space<vmem>>, %arg6: memref<128x128xbf16, #tpu.memory_space<vmem>>, %arg7: memref<1x128xf32, #tpu.memory_space<vmem>>, %arg8: memref<16x128xf32, #tpu.memory_space<vmem>>) attributes {dimension_semantics = [#tpu.dimension_semantics<parallel>], iteration_bounds = array<i64: 1>, scalar_prefetch = 0 : i64, scratch_operands = 0 : i64, tpu.core_type = #tpu.core_type<tc>, window_params = [{transform_indices = @transform_0, window_bounds = array<i64: 16, 256>}, {pipeline_mode = #tpu.pipeline_mode<synchronous>, transform_indices = @transform_1, window_bounds = array<i64: 256, 128>}, {pipeline_mode = #tpu.pipeline_mode<synchronous>, transform_indices = @transform_2, window_bounds = array<i64: 1, 128>}, {pipeline_mode = #tpu.pipeline_mode<synchronous>, transform_indices = @transform_3, window_bounds = array<i64: 128, 128>}, {pipeline_mode = #tpu.pipeline_mode<synchronous>, transform_indices = @transform_4, window_bounds = array<i64: 1, 128>}, {pipeline_mode = #tpu.pipeline_mode<synchronous>, transform_indices = @transform_5, window_bounds = array<i64: 128, 128>}, {pipeline_mode = #tpu.pipeline_mode<synchronous>, transform_indices = @transform_6, window_bounds = array<i64: 1, 128>}, {transform_indices = @transform_7, window_bounds = array<i64: 16, 128>}]} {
    %c0 = arith.constant 0 : index
    %c0_0 = arith.constant 0 : index
    %0 = vector.load %arg1[%c0, %c0_0] : memref<16x256xbf16, #tpu.memory_space<vmem>>, vector<16x256xbf16>
    %c0_1 = arith.constant 0 : index
    %c0_2 = arith.constant 0 : index
    %1 = vector.load %arg2[%c0_1, %c0_2] : memref<256x128xbf16, #tpu.memory_space<vmem>>, vector<256x128xbf16>
    %cst = arith.constant dense<0.000000e+00> : vector<16x128xf32>
    %2 = tpu.matmul %0, %1, %cst {dimension_numbers = #tpu.dot_dimension_numbers<[1], [0], [0], [1], [0, 0, 1, 1], [], []>} : vector<16x256xbf16>, vector<256x128xbf16>, vector<16x128xf32> -> vector<16x128xf32>
    %c0_3 = arith.constant 0 : index
    %c0_4 = arith.constant 0 : index
    %3 = vector.load %arg3[%c0_3, %c0_4] : memref<1x128xf32, #tpu.memory_space<vmem>>, vector<1x128xf32>
    %4 = vector.broadcast %3 : vector<1x128xf32> to vector<16x128xf32>
    %5 = arith.addf %2, %4 : vector<16x128xf32>
    %cst_5 = arith.constant 0.000000e+00 : f32
    %6 = vector.broadcast %cst_5 : f32 to vector<16x128xf32>
    %7 = arith.maximumf %5, %6 : vector<16x128xf32>
    %8 = arith.truncf %7 : vector<16x128xf32> to vector<16x128xbf16>
    %c0_6 = arith.constant 0 : index
    %c0_7 = arith.constant 0 : index
    %9 = vector.load %arg4[%c0_6, %c0_7] : memref<128x128xbf16, #tpu.memory_space<vmem>>, vector<128x128xbf16>
    %cst_8 = arith.constant dense<0.000000e+00> : vector<16x128xf32>
    %10 = tpu.matmul %8, %9, %cst_8 {dimension_numbers = #tpu.dot_dimension_numbers<[1], [0], [0], [1], [0, 0, 1, 1], [], []>} : vector<16x128xbf16>, vector<128x128xbf16>, vector<16x128xf32> -> vector<16x128xf32>
    %c0_9 = arith.constant 0 : index
    %c0_10 = arith.constant 0 : index
    %11 = vector.load %arg5[%c0_9, %c0_10] : memref<1x128xf32, #tpu.memory_space<vmem>>, vector<1x128xf32>
    %12 = vector.broadcast %11 : vector<1x128xf32> to vector<16x128xf32>
    %13 = arith.addf %10, %12 : vector<16x128xf32>
    %cst_11 = arith.constant 0.000000e+00 : f32
    %14 = vector.broadcast %cst_11 : f32 to vector<16x128xf32>
    %15 = arith.maximumf %13, %14 : vector<16x128xf32>
    %16 = arith.truncf %15 : vector<16x128xf32> to vector<16x128xbf16>
    %c0_12 = arith.constant 0 : index
    %c0_13 = arith.constant 0 : index
    %17 = vector.load %arg6[%c0_12, %c0_13] : memref<128x128xbf16, #tpu.memory_space<vmem>>, vector<128x128xbf16>
    %cst_14 = arith.constant dense<0.000000e+00> : vector<16x128xf32>
    %18 = tpu.matmul %16, %17, %cst_14 {dimension_numbers = #tpu.dot_dimension_numbers<[1], [0], [0], [1], [0, 0, 1, 1], [], []>} : vector<16x128xbf16>, vector<128x128xbf16>, vector<16x128xf32> -> vector<16x128xf32>
    %c0_15 = arith.constant 0 : index
    %c0_16 = arith.constant 0 : index
    %19 = vector.load %arg7[%c0_15, %c0_16] : memref<1x128xf32, #tpu.memory_space<vmem>>, vector<1x128xf32>
    %20 = vector.broadcast %19 : vector<1x128xf32> to vector<16x128xf32>
    %21 = arith.addf %18, %20 : vector<16x128xf32>
    %c0_17 = arith.constant 0 : index
    %c0_18 = arith.constant 0 : index
    %22 = vector.load %arg8[%c0_17, %c0_18] : memref<16x128xf32, #tpu.memory_space<vmem>>, vector<16x128xf32>
    tpu.vector_store %arg8[%c0_17, %c0_18], %21 {strides = array<i32>} : memref<16x128xf32, #tpu.memory_space<vmem>>, vector<16x128xf32>,
    return
  }
  func.func @transform_0(%arg0: i32) -> (i32, i32) {
    %c0_i32 = arith.constant 0 : i32
    %c0_i32_0 = arith.constant 0 : i32
    return %arg0, %c0_i32 : i32, i32
  }
  func.func @transform_1(%arg0: i32) -> (i32, i32) {
    %c0_i32 = arith.constant 0 : i32
    %c0_i32_0 = arith.constant 0 : i32
    %c0_i32_1 = arith.constant 0 : i32
    return %c0_i32, %c0_i32_0 : i32, i32
  }
  func.func @transform_2(%arg0: i32) -> (i32, i32) {
    %c0_i32 = arith.constant 0 : i32
    %c0_i32_0 = arith.constant 0 : i32
    %c0_i32_1 = arith.constant 0 : i32
    return %c0_i32, %c0_i32_0 : i32, i32
  }
  func.func @transform_3(%arg0: i32) -> (i32, i32) {
    %c0_i32 = arith.constant 0 : i32
    %c0_i32_0 = arith.constant 0 : i32
    %c0_i32_1 = arith.constant 0 : i32
    return %c0_i32, %c0_i32_0 : i32, i32
  }
  func.func @transform_4(%arg0: i32) -> (i32, i32) {
    %c0_i32 = arith.constant 0 : i32
    %c0_i32_0 = arith.constant 0 : i32
    %c0_i32_1 = arith.constant 0 : i32
    return %c0_i32, %c0_i32_0 : i32, i32
  }
  func.func @transform_5(%arg0: i32) -> (i32, i32) {
    %c0_i32 = arith.constant 0 : i32
    %c0_i32_0 = arith.constant 0 : i32
    %c0_i32_1 = arith.constant 0 : i32
    return %c0_i32, %c0_i32_0 : i32, i32
  }
  func.func @transform_6(%arg0: i32) -> (i32, i32) {
    %c0_i32 = arith.constant 0 : i32
    %c0_i32_0 = arith.constant 0 : i32
    %c0_i32_1 = arith.constant 0 : i32
    return %c0_i32, %c0_i32_0 : i32, i32
  }
  func.func @transform_7(%arg0: i32) -> (i32, i32) {
    %c0_i32 = arith.constant 0 : i32
    %c0_i32_0 = arith.constant 0 : i32
    return %arg0, %c0_i32 : i32, i32
  }
}

</mosaic_0001>

<llo_original>
// kernel: tpu_custom_call.1
$region0: #{tpu_custom_call.1}
  #allocation0 [shape = 'u32[]', space=smem, size = 0x4, offset = 0x4, fixed_abs, tag = 'smem constant byte address 0x4 - core index']
  #allocation1 [shape = 'u32[144,128]{1,0:T(1,128)}', space=vmem, size = 0x12000, scoped, tag = 'internal scratch']
  %s0 = inlined_call_operand.hbm [shape: bf16[16,256], index: 0, kind: input, shape index: {}]
  %s1 = inlined_call_operand.hbm [shape: bf16[256,128], index: 1, kind: input, shape index: {}]
  %s2 = inlined_call_operand.hbm [shape: f32[1,128], index: 2, kind: input, shape index: {}]
  %s3 = inlined_call_operand.hbm [shape: bf16[128,128], index: 3, kind: input, shape index: {}]
  %s4 = inlined_call_operand.hbm [shape: f32[1,128], index: 4, kind: input, shape index: {}]
  %s5 = inlined_call_operand.hbm [shape: bf16[128,128], index: 5, kind: input, shape index: {}]
  %s6 = inlined_call_operand.hbm [shape: f32[1,128], index: 6, kind: input, shape index: {}]
  %s7 = inlined_call_operand.hbm [shape: f32[16,128], index: 7, kind: output, shape index: {}]
  %s8 = sld [smem:[#allocation0]]
  $region66: #{tpu_custom_call.1} parent=0
    _
  %s10 = ssub.s32 1, %s8
  %s11 = scalar_select 0, %s10, %s8
  $region1: #{tpu_custom_call.1} parent=0
    #allocation2 [shape = 'u8[8192]{0}', space=vmem, size = 0x2000, scoped, tag = 'input window, operand 0, single buffered']
    #allocation3 [shape = 's32[1]{0}', space=sflag, size = 0x4, scoped, tag = 'scoped memory for tpu_custom_call.1']
    #allocation4 [shape = 's32[1]{0}', space=sflag, size = 0x4, scoped, tag = 'scoped memory for tpu_custom_call.1']
    #allocation5 [shape = 'u8[65536]{0}', space=vmem, size = 0x10000, scoped, tag = 'input window, operand 1, single buffered']
    #allocation6 [shape = 's32[1]{0}', space=sflag, size = 0x4, scoped, tag = 'scoped memory for tpu_custom_call.1']
    #allocation7 [shape = 'u8[512]{0}', space=vmem, size = 0x400, scoped, tag = 'input window, operand 2, single buffered']
    #allocation8 [shape = 'u8[32768]{0}', space=vmem, size = 0x8000, scoped, tag = 'input window, operand 3, single buffered']
    #allocation9 [shape = 's32[1]{0}', space=sflag, size = 0x4, scoped, tag = 'scoped memory for tpu_custom_call.1']
    #allocation10 [shape = 'u8[512]{0}', space=vmem, size = 0x400, scoped, tag = 'input window, operand 4, single buffered']
    #allocation11 [shape = 'u8[32768]{0}', space=vmem, size = 0x8000, scoped, tag = 'input window, operand 5, single buffered']
    #allocation12 [shape = 's32[1]{0}', space=sflag, size = 0x4, scoped, tag = 'scoped memory for tpu_custom_call.1']
    #allocation13 [shape = 'u8[512]{0}', space=vmem, size = 0x400, scoped, tag = 'input window, operand 6, single buffered']
    #allocation14 [shape = 'u8[8192]{0}', space=vmem, size = 0x2000, scoped, tag = 'output window, operand 0, single buffered']
    %12 = vsyncpa [#allocation3], 0
    %13 = vsyncpa [#allocation6], 0
    %14 = vsyncpa [#allocation9], 0
    %15 = vsyncpa [#allocation12], 0
    %16 = vsyncpa [#allocation4], 0
    // Predicated region
    $region2: #{tpu_custom_call.1} parent=1 // pred_check
      _
    $region3: #{tpu_custom_call.1} parent=1 // pred_check_branch
      %18 = sbr.rel (0) target = $region5
    $region4: #{tpu_custom_call.1} parent=1 // pred_region
      %s20 = ssub.s32 256, 256
      %21 = vsyncadd [#allocation3], %s20
      %s22 = sshll.u32 [#allocation2], 4
      %s23 = int_to_ptr.vmem [resolvable:$true] %s22
      %28 = dma.hbm_to_vmem [thread:$0]  %s0, 256, %s23, [#allocation3], 128, 128, 8
    $region5: #{tpu_custom_call.1} parent=1 // pred_fallthru
      _
    // Predicated region
    $region6: #{tpu_custom_call.1} parent=1 // pred_check
      _
    $region7: #{tpu_custom_call.1} parent=1 // pred_check_branch
      %30 = sbr.rel (0) target = $region9
    $region8: #{tpu_custom_call.1} parent=1 // pred_region
      %s32 = ssub.s32 2048, 2048
      %33 = vsyncadd [#allocation6], %s32
      %s34 = sshll.u32 [#allocation5], 4
      %s35 = int_to_ptr.vmem [resolvable:$true] %s34
      %40 = dma.hbm_to_vmem [thread:$0]  %s1, 2048, %s35, [#allocation6], 64, 64, 4
    $region9: #{tpu_custom_call.1} parent=1 // pred_fallthru
      _
    // Predicated region
    $region10: #{tpu_custom_call.1} parent=1 // pred_check
      _
    $region11: #{tpu_custom_call.1} parent=1 // pred_check_branch
      %42 = sbr.rel (0) target = $region13
    $region12: #{tpu_custom_call.1} parent=1 // pred_region
      %s44 = ssub.s32 16, 16
      %45 = vsyncadd [#allocation6], %s44
      %s47 = sshll.u32 [#allocation7], 4
      %s48 = int_to_ptr.vmem [resolvable:$true] %s47
      %50 = dma.hbm_to_vmem [thread:$0]  %s2, 16, %s48, [#allocation6]
    $region13: #{tpu_custom_call.1} parent=1 // pred_fallthru
      _
    // Predicated region
    $region14: #{tpu_custom_call.1} parent=1 // pred_check
      _
    $region15: #{tpu_custom_call.1} parent=1 // pred_check_branch
      %52 = sbr.rel (0) target = $region17
    $region16: #{tpu_custom_call.1} parent=1 // pred_region
      %s54 = ssub.s32 1024, 1024
      %55 = vsyncadd [#allocation9], %s54
      %s56 = sshll.u32 [#allocation8], 4
      %s57 = int_to_ptr.vmem [resolvable:$true] %s56
      %62 = dma.hbm_to_vmem [thread:$0]  %s3, 1024, %s57, [#allocation9], 64, 64, 4
    $region17: #{tpu_custom_call.1} parent=1 // pred_fallthru
      _
    // Predicated region
    $region18: #{tpu_custom_call.1} parent=1 // pred_check
      _
    $region19: #{tpu_custom_call.1} parent=1 // pred_check_branch
      %64 = sbr.rel (0) target = $region21
    $region20: #{tpu_custom_call.1} parent=1 // pred_region
      %s66 = ssub.s32 16, 16
      %67 = vsyncadd [#allocation9], %s66
      %s69 = sshll.u32 [#allocation10], 4
      %s70 = int_to_ptr.vmem [resolvable:$true] %s69
      %72 = dma.hbm_to_vmem [thread:$0]  %s4, 16, %s70, [#allocation9]
    $region21: #{tpu_custom_call.1} parent=1 // pred_fallthru
      _
    // Predicated region
    $region22: #{tpu_custom_call.1} parent=1 // pred_check
      _
    $region23: #{tpu_custom_call.1} parent=1 // pred_check_branch
      %74 = sbr.rel (0) target = $region25
    $region24: #{tpu_custom_call.1} parent=1 // pred_region
      %s76 = ssub.s32 1024, 1024
      %77 = vsyncadd [#allocation12], %s76
      %s78 = sshll.u32 [#allocation11], 4
      %s79 = int_to_ptr.vmem [resolvable:$true] %s78
      %84 = dma.hbm_to_vmem [thread:$0]  %s5, 1024, %s79, [#allocation12], 64, 64, 4
    $region25: #{tpu_custom_call.1} parent=1 // pred_fallthru
      _
    // Predicated region
    $region26: #{tpu_custom_call.1} parent=1 // pred_check
      _
    $region27: #{tpu_custom_call.1} parent=1 // pred_check_branch
      %86 = sbr.rel (0) target = $region29
    $region28: #{tpu_custom_call.1} parent=1 // pred_region
      %s88 = ssub.s32 16, 16
      %89 = vsyncadd [#allocation12], %s88
      %s91 = sshll.u32 [#allocation13], 4
      %s92 = int_to_ptr.vmem [resolvable:$true] %s91
      %94 = dma.hbm_to_vmem [thread:$0]  %s6, 16, %s92, [#allocation12]
    $region29: #{tpu_custom_call.1} parent=1 // pred_fallthru
      _
    // Predicated region
    $region30: #{tpu_custom_call.1} parent=1 // pred_check
      _
    $region31: #{tpu_custom_call.1} parent=1 // pred_check_branch
      %96 = sbr.rel (0) target = $region33
    $region32: #{tpu_custom_call.1} parent=1 // pred_region
      %97 = dma.done [#allocation3], 256
    $region33: #{tpu_custom_call.1} parent=1 // pred_fallthru
      _
    // Predicated region
    $region34: #{tpu_custom_call.1} parent=1 // pred_check
      _
    $region35: #{tpu_custom_call.1} parent=1 // pred_check_branch
      %99 = sbr.rel (0) target = $region37
    $region36: #{tpu_custom_call.1} parent=1 // pred_region
      %100 = dma.done [#allocation6], 2048
    $region37: #{tpu_custom_call.1} parent=1 // pred_fallthru
      _
    // Predicated region
    $region38: #{tpu_custom_call.1} parent=1 // pred_check
      _
    $region39: #{tpu_custom_call.1} parent=1 // pred_check_branch
      %102 = sbr.rel (0) target = $region41
    $region40: #{tpu_custom_call.1} parent=1 // pred_region
      %103 = dma.done [#allocation6], 16
    $region41: #{tpu_custom_call.1} parent=1 // pred_fallthru
      _
    // Predicated region
    $region42: #{tpu_custom_call.1} parent=1 // pred_check
      _
    $region43: #{tpu_custom_call.1} parent=1 // pred_check_branch
      %105 = sbr.rel (0) target = $region45
    $region44: #{tpu_custom_call.1} parent=1 // pred_region
      %106 = dma.done [#allocation9], 1024
    $region45: #{tpu_custom_call.1} parent=1 // pred_fallthru
      _
    // Predicated region
    $region46: #{tpu_custom_call.1} parent=1 // pred_check
      _
    $region47: #{tpu_custom_call.1} parent=1 // pred_check_branch
      %108 = sbr.rel (0) target = $region49
    $region48: #{tpu_custom_call.1} parent=1 // pred_region
      %109 = dma.done [#allocation9], 16
    $region49: #{tpu_custom_call.1} parent=1 // pred_fallthru
      _
    // Predicated region
    $region50: #{tpu_custom_call.1} parent=1 // pred_check
      _
    $region51: #{tpu_custom_call.1} parent=1 // pred_check_branch
      %111 = sbr.rel (0) target = $region53
    $region52: #{tpu_custom_call.1} parent=1 // pred_region
      %112 = dma.done [#allocation12], 1024
    $region53: #{tpu_custom_call.1} parent=1 // pred_fallthru
      _
    // Predicated region
    $region54: #{tpu_custom_call.1} parent=1 // pred_check
      _
    $region55: #{tpu_custom_call.1} parent=1 // pred_check_branch
      %114 = sbr.rel (0) target = $region57
    $region56: #{tpu_custom_call.1} parent=1 // pred_region
      %115 = dma.done [#allocation12], 16
    $region57: #{tpu_custom_call.1} parent=1 // pred_fallthru
      _
    %v117 = vld [vmem:[#allocation2] sm:$0xff]
    %v118 = vld [vmem:[#allocation2 + $0x8] sm:$0xff]
    %v119 = vld [vmem:[#allocation5] sm:$0xf]
    %v120 = vld [vmem:[#allocation5 + $0x4] sm:$0xf]
    %v121 = vld [vmem:[#allocation5 + $0x8] sm:$0xf]
    %v122 = vld [vmem:[#allocation5 + $0xc] sm:$0xf]
    %v123 = vld [vmem:[#allocation5 + $0x10] sm:$0xf]
    %v124 = vld [vmem:[#allocation5 + $0x14] sm:$0xf]
    %v125 = vld [vmem:[#allocation5 + $0x18] sm:$0xf]
    %v126 = vld [vmem:[#allocation5 + $0x1c] sm:$0xf]
    %v127 = vld [vmem:[#allocation5 + $0x20] sm:$0xf]
    %v128 = vld [vmem:[#allocation5 + $0x24] sm:$0xf]
    %v129 = vld [vmem:[#allocation5 + $0x28] sm:$0xf]
    %v130 = vld [vmem:[#allocation5 + $0x2c] sm:$0xf]
    %v131 = vld [vmem:[#allocation5 + $0x30] sm:$0xf]
    %v132 = vld [vmem:[#allocation5 + $0x34] sm:$0xf]
    %v133 = vld [vmem:[#allocation5 + $0x38] sm:$0xf]
    %v134 = vld [vmem:[#allocation5 + $0x3c] sm:$0xf]
    %v135 = vld [vmem:[#allocation5 + $0x40] sm:$0xf]
    %v136 = vld [vmem:[#allocation5 + $0x44] sm:$0xf]
    %v137 = vld [vmem:[#allocation5 + $0x48] sm:$0xf]
    %v138 = vld [vmem:[#allocation5 + $0x4c] sm:$0xf]
    %v139 = vld [vmem:[#allocation5 + $0x50] sm:$0xf]
    %v140 = vld [vmem:[#allocation5 + $0x54] sm:$0xf]
    %v141 = vld [vmem:[#allocation5 + $0x58] sm:$0xf]
    %v142 = vld [vmem:[#allocation5 + $0x5c] sm:$0xf]
    %v143 = vld [vmem:[#allocation5 + $0x60] sm:$0xf]
    %v144 = vld [vmem:[#allocation5 + $0x64] sm:$0xf]
    %v145 = vld [vmem:[#allocation5 + $0x68] sm:$0xf]
    %v146 = vld [vmem:[#allocation5 + $0x6c] sm:$0xf]
    %v147 = vld [vmem:[#allocation5 + $0x70] sm:$0xf]
    %v148 = vld [vmem:[#allocation5 + $0x74] sm:$0xf]
    %v149 = vld [vmem:[#allocation5 + $0x78] sm:$0xf]
    %v150 = vld [vmem:[#allocation5 + $0x7c] sm:$0xf]
    %v151 = vld [vmem:[#allocation7] sm:$0x1]
    %v153 = vlaneseq
    %v154 = vshrl.u32 %v153, 7
    %v155 = vsub.s32 0, %v154
    %v156 = vrot.slane %v151, %v155
    %v160 = vunpack.c.l.b16 %v117
    %v161 = vunpack.c.h.b16 %v117
    %v162 = vunpack.c.l.b16 %v118
    %v163 = vunpack.c.h.b16 %v118
    %v164 = vpack.c.b16 %v162, %v160
    %v165 = vpack.c.b16 %v163, %v161
    %v200 = vunpack.c.l.b16 %v119
    %v201 = vunpack.c.l.b16 %v120
    %v202 = vunpack.c.l.b16 %v121
    %v203 = vunpack.c.l.b16 %v122
    %v204 = vunpack.c.l.b16 %v123
    %v205 = vunpack.c.l.b16 %v124
    %v206 = vunpack.c.l.b16 %v125
    %v207 = vunpack.c.l.b16 %v126
    %v208 = vunpack.c.l.b16 %v127
    %v209 = vunpack.c.l.b16 %v128
    %v210 = vunpack.c.l.b16 %v129
    %v211 = vunpack.c.l.b16 %v130
    %v212 = vunpack.c.l.b16 %v131
    %v213 = vunpack.c.l.b16 %v132
    %v214 = vunpack.c.l.b16 %v133
    %v215 = vunpack.c.l.b16 %v134
    %v216 = vunpack.c.l.b16 %v135
    %v217 = vunpack.c.l.b16 %v136
    %v218 = vunpack.c.l.b16 %v137
    %v219 = vunpack.c.l.b16 %v138
    %v220 = vunpack.c.l.b16 %v139
    %v221 = vunpack.c.l.b16 %v140
    %v222 = vunpack.c.l.b16 %v141
    %v223 = vunpack.c.l.b16 %v142
    %v224 = vunpack.c.l.b16 %v143
    %v225 = vunpack.c.l.b16 %v144
    %v226 = vunpack.c.l.b16 %v145
    %v227 = vunpack.c.l.b16 %v146
    %v228 = vunpack.c.l.b16 %v147
    %v229 = vunpack.c.l.b16 %v148
    %v230 = vunpack.c.l.b16 %v149
    %v231 = vunpack.c.l.b16 %v150
    %v232 = vpack.c.b16 %v201, %v200
    %v233 = vpack.c.b16 %v203, %v202
    %v234 = vpack.c.b16 %v205, %v204
    %v235 = vpack.c.b16 %v207, %v206
    %v236 = vpack.c.b16 %v209, %v208
    %v237 = vpack.c.b16 %v211, %v210
    %v238 = vpack.c.b16 %v213, %v212
    %v239 = vpack.c.b16 %v215, %v214
    %v240 = vpack.c.b16 %v217, %v216
    %v241 = vpack.c.b16 %v219, %v218
    %v242 = vpack.c.b16 %v221, %v220
    %v243 = vpack.c.b16 %v223, %v222
    %v244 = vpack.c.b16 %v225, %v224
    %v245 = vpack.c.b16 %v227, %v226
    %v246 = vpack.c.b16 %v229, %v228
    %v247 = vpack.c.b16 %v231, %v230
    %264 = vmatprep.subr.bf16.mxu0 0
    %265 = vmatpush1.bf16.msra.mxu0 %v232
    %266 = vmatprep.subr.bf16.mxu0 0
    %267 = vmatpush1.bf16.msra.mxu0 %v233
    %268 = vmatprep.subr.bf16.mxu0 0
    %269 = vmatpush1.bf16.msra.mxu0 %v234
    %270 = vmatprep.subr.bf16.mxu0 0
    %271 = vmatpush1.bf16.msra.mxu0 %v235
    %272 = vmatprep.subr.bf16.mxu0 0
    %273 = vmatpush1.bf16.msra.mxu0 %v236
    %274 = vmatprep.subr.bf16.mxu0 0
    %275 = vmatpush1.bf16.msra.mxu0 %v237
    %276 = vmatprep.subr.bf16.mxu0 0
    %277 = vmatpush1.bf16.msra.mxu0 %v238
    %278 = vmatprep.subr.bf16.mxu0 0
    %279 = vmatpush1.bf16.msra.mxu0 %v239
    %280 = vmatprep.subr.bf16.mxu0 0
    %281 = vmatpush1.bf16.msra.mxu0 %v240
    %282 = vmatprep.subr.bf16.mxu0 0
    %283 = vmatpush1.bf16.msra.mxu0 %v241
    %284 = vmatprep.subr.bf16.mxu0 0
    %285 = vmatpush1.bf16.msra.mxu0 %v242
    %286 = vmatprep.subr.bf16.mxu0 0
    %287 = vmatpush1.bf16.msra.mxu0 %v243
    %288 = vmatprep.subr.bf16.mxu0 0
    %289 = vmatpush1.bf16.msra.mxu0 %v244
    %290 = vmatprep.subr.bf16.mxu0 0
    %291 = vmatpush1.bf16.msra.mxu0 %v245
    %292 = vmatprep.subr.bf16.mxu0 0
    %293 = vmatpush1.bf16.msra.mxu0 %v246
    %294 = vmatprep.subr.bf16.mxu0 0
    %295 = vmatpush1.bf16.msra.mxu0 %v247
    %296 = vmatprep.mubr.bf16.mxu0 %v165
    %297 = vmatmul.mubr.bf16.gmra.mrb[0].mxu0 %v164
    %v298 = vpop.f32.mrb[0].mxu0
    %v299 = vadd.f32 %v156, %v298
    %v300 = vpop.f32.mrb[0].mxu0
    %v301 = vpop.f32.mrb[0].mxu0
    %v302 = vadd.f32 %v156, %v301
    %v303 = vpop.f32.mrb[0].mxu0
    %304 = vdwg.mxu0
    %v305 = vmax.f32 %v299, 0.0
    %v306 = vmax.f32 %v302, 0.0
    %v307 = vpack.c.bf16 %v306, %v305
    %v308 = vld [vmem:[#allocation8] sm:$0xf]
    %v309 = vld [vmem:[#allocation8 + $0x4] sm:$0xf]
    %v310 = vld [vmem:[#allocation8 + $0x8] sm:$0xf]
    %v311 = vld [vmem:[#allocation8 + $0xc] sm:$0xf]
    %v312 = vld [vmem:[#allocation8 + $0x10] sm:$0xf]
    %v313 = vld [vmem:[#allocation8 + $0x14] sm:$0xf]
    %v314 = vld [vmem:[#allocation8 + $0x18] sm:$0xf]
    %v315 = vld [vmem:[#allocation8 + $0x1c] sm:$0xf]
    %v316 = vld [vmem:[#allocation8 + $0x20] sm:$0xf]
    %v317 = vld [vmem:[#allocation8 + $0x24] sm:$0xf]
    %v318 = vld [vmem:[#allocation8 + $0x28] sm:$0xf]
    %v319 = vld [vmem:[#allocation8 + $0x2c] sm:$0xf]
    %v320 = vld [vmem:[#allocation8 + $0x30] sm:$0xf]
    %v321 = vld [vmem:[#allocation8 + $0x34] sm:$0xf]
    %v322 = vld [vmem:[#allocation8 + $0x38] sm:$0xf]
    %v323 = vld [vmem:[#allocation8 + $0x3c] sm:$0xf]
    %v324 = vld [vmem:[#allocation10] sm:$0x1]
    %v326 = vlaneseq
    %v327 = vshrl.u32 %v326, 7
    %v328 = vsub.s32 0, %v327
    %v329 = vrot.slane %v324, %v328
    %v347 = vunpack.c.l.b16 %v308
    %v348 = vunpack.c.l.b16 %v309
    %v349 = vunpack.c.l.b16 %v310
    %v350 = vunpack.c.l.b16 %v311
    %v351 = vunpack.c.l.b16 %v312
    %v352 = vunpack.c.l.b16 %v313
    %v353 = vunpack.c.l.b16 %v314
    %v354 = vunpack.c.l.b16 %v315
    %v355 = vunpack.c.l.b16 %v316
    %v356 = vunpack.c.l.b16 %v317
    %v357 = vunpack.c.l.b16 %v318
    %v358 = vunpack.c.l.b16 %v319
    %v359 = vunpack.c.l.b16 %v320
    %v360 = vunpack.c.l.b16 %v321
    %v361 = vunpack.c.l.b16 %v322
    %v362 = vunpack.c.l.b16 %v323
    %v363 = vpack.c.b16 %v348, %v347
    %v364 = vpack.c.b16 %v350, %v349
    %v365 = vpack.c.b16 %v352, %v351
    %v366 = vpack.c.b16 %v354, %v353
    %v367 = vpack.c.b16 %v356, %v355
    %v368 = vpack.c.b16 %v358, %v357
    %v369 = vpack.c.b16 %v360, %v359
    %v370 = vpack.c.b16 %v362, %v361
    %379 = vmatprep.subr.bf16.mxu0 0
    %380 = vmatpush1.bf16.msra.mxu0 %v363
    %381 = vmatprep.subr.bf16.mxu0 0
    %382 = vmatpush1.bf16.msra.mxu0 %v364
    %383 = vmatprep.subr.bf16.mxu0 0
    %384 = vmatpush1.bf16.msra.mxu0 %v365
    %385 = vmatprep.subr.bf16.mxu0 0
    %386 = vmatpush1.bf16.msra.mxu0 %v366
    %387 = vmatprep.subr.bf16.mxu0 0
    %388 = vmatpush1.bf16.msra.mxu0 %v367
    %389 = vmatprep.subr.bf16.mxu0 0
    %390 = vmatpush1.bf16.msra.mxu0 %v368
    %391 = vmatprep.subr.bf16.mxu0 0
    %392 = vmatpush1.bf16.msra.mxu0 %v369
    %393 = vmatprep.subr.bf16.mxu0 0
    %394 = vmatpush1.bf16.msra.mxu0 %v370
    %395 = vmatprep.subr.bf16.mxu0 0
    %396 = vmatpush1.bf16.msra.mxu0 0
    %397 = vmatprep.subr.bf16.mxu0 0
    %398 = vmatpush1.bf16.msra.mxu0 0
    %399 = vmatprep.subr.bf16.mxu0 0
    %400 = vmatpush1.bf16.msra.mxu0 0
    %401 = vmatprep.subr.bf16.mxu0 0
    %402 = vmatpush1.bf16.msra.mxu0 0
    %403 = vmatprep.subr.bf16.mxu0 0
    %404 = vmatpush1.bf16.msra.mxu0 0
    %405 = vmatprep.subr.bf16.mxu0 0
    %406 = vmatpush1.bf16.msra.mxu0 0
    %407 = vmatprep.subr.bf16.mxu0 0
    %408 = vmatpush1.bf16.msra.mxu0 0
    %409 = vmatprep.subr.bf16.mxu0 0
    %410 = vmatpush1.bf16.msra.mxu0 0
    %411 = vmatprep.mubr.bf16.mxu0 0
    %412 = vmatmul.mubr.bf16.gmra.mrb[0].mxu0 %v307
    %v413 = vpop.f32.mrb[0].mxu0
    %v414 = vadd.f32 %v329, %v413
    %v415 = vpop.f32.mrb[0].mxu0
    %v416 = vpop.f32.mrb[0].mxu0
    %v417 = vadd.f32 %v329, %v416
    %v418 = vpop.f32.mrb[0].mxu0
    %419 = vdwg.mxu0
    %v420 = vmax.f32 %v414, 0.0
    %v421 = vmax.f32 %v417, 0.0
    %v422 = vpack.c.bf16 %v421, %v420
    %v423 = vld [vmem:[#allocation11] sm:$0xf]
    %v424 = vld [vmem:[#allocation11 + $0x4] sm:$0xf]
    %v425 = vld [vmem:[#allocation11 + $0x8] sm:$0xf]
    %v426 = vld [vmem:[#allocation11 + $0xc] sm:$0xf]
    %v427 = vld [vmem:[#allocation11 + $0x10] sm:$0xf]
    %v428 = vld [vmem:[#allocation11 + $0x14] sm:$0xf]
    %v429 = vld [vmem:[#allocation11 + $0x18] sm:$0xf]
    %v430 = vld [vmem:[#allocation11 + $0x1c] sm:$0xf]
    %v431 = vld [vmem:[#allocation11 + $0x20] sm:$0xf]
    %v432 = vld [vmem:[#allocation11 + $0x24] sm:$0xf]
    %v433 = vld [vmem:[#allocation11 + $0x28] sm:$0xf]
    %v434 = vld [vmem:[#allocation11 + $0x2c] sm:$0xf]
    %v435 = vld [vmem:[#allocation11 + $0x30] sm:$0xf]
    %v436 = vld [vmem:[#allocation11 + $0x34] sm:$0xf]
    %v437 = vld [vmem:[#allocation11 + $0x38] sm:$0xf]
    %v438 = vld [vmem:[#allocation11 + $0x3c] sm:$0xf]
    %v439 = vld [vmem:[#allocation13] sm:$0x1]
    %v441 = vlaneseq
    %v442 = vshrl.u32 %v441, 7
    %v443 = vsub.s32 0, %v442
    %v444 = vrot.slane %v439, %v443
    %v462 = vunpack.c.l.b16 %v423
    %v463 = vunpack.c.l.b16 %v424
    %v464 = vunpack.c.l.b16 %v425
    %v465 = vunpack.c.l.b16 %v426
    %v466 = vunpack.c.l.b16 %v427
    %v467 = vunpack.c.l.b16 %v428
    %v468 = vunpack.c.l.b16 %v429
    %v469 = vunpack.c.l.b16 %v430
    %v470 = vunpack.c.l.b16 %v431
    %v471 = vunpack.c.l.b16 %v432
    %v472 = vunpack.c.l.b16 %v433
    %v473 = vunpack.c.l.b16 %v434
    %v474 = vunpack.c.l.b16 %v435
    %v475 = vunpack.c.l.b16 %v436
    %v476 = vunpack.c.l.b16 %v437
    %v477 = vunpack.c.l.b16 %v438
    %v478 = vpack.c.b16 %v463, %v462
    %v479 = vpack.c.b16 %v465, %v464
    %v480 = vpack.c.b16 %v467, %v466
    %v481 = vpack.c.b16 %v469, %v468
    %v482 = vpack.c.b16 %v471, %v470
    %v483 = vpack.c.b16 %v473, %v472
    %v484 = vpack.c.b16 %v475, %v474
    %v485 = vpack.c.b16 %v477, %v476
    %494 = vmatprep.subr.bf16.mxu0 0
    %495 = vmatpush1.bf16.msra.mxu0 %v478
    %496 = vmatprep.subr.bf16.mxu0 0
    %497 = vmatpush1.bf16.msra.mxu0 %v479
    %498 = vmatprep.subr.bf16.mxu0 0
    %499 = vmatpush1.bf16.msra.mxu0 %v480
    %500 = vmatprep.subr.bf16.mxu0 0
    %501 = vmatpush1.bf16.msra.mxu0 %v481
    %502 = vmatprep.subr.bf16.mxu0 0
    %503 = vmatpush1.bf16.msra.mxu0 %v482
    %504 = vmatprep.subr.bf16.mxu0 0
    %505 = vmatpush1.bf16.msra.mxu0 %v483
    %506 = vmatprep.subr.bf16.mxu0 0
    %507 = vmatpush1.bf16.msra.mxu0 %v484
    %508 = vmatprep.subr.bf16.mxu0 0
    %509 = vmatpush1.bf16.msra.mxu0 %v485
    %510 = vmatprep.subr.bf16.mxu0 0
    %511 = vmatpush1.bf16.msra.mxu0 0
    %512 = vmatprep.subr.bf16.mxu0 0
    %513 = vmatpush1.bf16.msra.mxu0 0
    %514 = vmatprep.subr.bf16.mxu0 0
    %515 = vmatpush1.bf16.msra.mxu0 0
    %516 = vmatprep.subr.bf16.mxu0 0
    %517 = vmatpush1.bf16.msra.mxu0 0
    %518 = vmatprep.subr.bf16.mxu0 0
    %519 = vmatpush1.bf16.msra.mxu0 0
    %520 = vmatprep.subr.bf16.mxu0 0
    %521 = vmatpush1.bf16.msra.mxu0 0
    %522 = vmatprep.subr.bf16.mxu0 0
    %523 = vmatpush1.bf16.msra.mxu0 0
    %524 = vmatprep.subr.bf16.mxu0 0
    %525 = vmatpush1.bf16.msra.mxu0 0
    %526 = vmatprep.mubr.bf16.mxu0 0
    %527 = vmatmul.mubr.bf16.gmra.mrb[0].mxu0 %v422
    %v528 = vpop.f32.mrb[0].mxu0
    %v529 = vadd.f32 %v444, %v528
    %v530 = vpop.f32.mrb[0].mxu0
    %v531 = vpop.f32.mrb[0].mxu0
    %v532 = vadd.f32 %v444, %v531
    %v533 = vpop.f32.mrb[0].mxu0
    %534 = vdwg.mxu0
    %535 = vst [vmem:[#allocation14] sm:$0xff] %v529
    %536 = vst [vmem:[#allocation14 + $0x8] sm:$0xff] %v532
    // Predicated region
    $region58: #{tpu_custom_call.1} parent=1 // pred_check
      _
    $region59: #{tpu_custom_call.1} parent=1 // pred_check_branch
      %538 = sbr.rel (0) target = $region61
    $region60: #{tpu_custom_call.1} parent=1 // pred_region
      %s540 = ssub.s32 256, 256
      %541 = vsyncadd [#allocation4], %s540
      %s542 = sshll.u32 [#allocation14], 4
      %s543 = int_to_ptr.vmem [resolvable:$true] %s542
      %548 = dma.vmem_to_hbm [thread:$0]  %s543, 256, %s7, [#allocation4], 128, 128, 8
    $region61: #{tpu_custom_call.1} parent=1 // pred_fallthru
      _
    // Predicated region
    $region62: #{tpu_custom_call.1} parent=1 // pred_check
      _
    $region63: #{tpu_custom_call.1} parent=1 // pred_check_branch
      %550 = sbr.rel (0) target = $region65
    $region64: #{tpu_custom_call.1} parent=1 // pred_region
      %551 = dma.done [#allocation4], 256
    $region65: #{tpu_custom_call.1} parent=1 // pred_fallthru
      _
    %552 = vsyncpa [#allocation3], 1
    %553 = vsyncpa [#allocation6], 1
    %554 = vsyncpa [#allocation9], 1
    %555 = vsyncpa [#allocation12], 1
    %556 = vsyncpa [#allocation4], 1

// kernel: tpu_custom_call.1
$region0: #{tpu_custom_call.1}
  #allocation0 [shape = 'u32[]', space=smem, size = 0x4, offset = 0x4, fixed_abs, tag = 'smem constant byte address 0x4 - core index']
  #allocation1 [shape = 'u32[144,128]{1,0:T(1,128)}', space=vmem, size = 0x12000, scoped, tag = 'internal scratch']
  %s0 = inlined_call_operand.hbm [shape: bf16[16,256], index: 0, kind: input, shape index: {}]
  %s1 = inlined_call_operand.hbm [shape: bf16[256,128], index: 1, kind: input, shape index: {}]
  %s2 = inlined_call_operand.hbm [shape: f32[1,128], index: 2, kind: input, shape index: {}]
  %s3 = inlined_call_operand.hbm [shape: bf16[128,128], index: 3, kind: input, shape index: {}]
  %s4 = inlined_call_operand.hbm [shape: f32[1,128], index: 4, kind: input, shape index: {}]
  %s5 = inlined_call_operand.hbm [shape: bf16[128,128], index: 5, kind: input, shape index: {}]
  %s6 = inlined_call_operand.hbm [shape: f32[1,128], index: 6, kind: input, shape index: {}]
  %s7 = inlined_call_operand.hbm [shape: f32[16,128], index: 7, kind: output, shape index: {}]
  %s8 = sld [smem:[#allocation0]]
  $region66: #{tpu_custom_call.1} parent=0
    _
  %s10 = ssub.s32 1, %s8
  %s11 = scalar_select 0, %s10, %s8
  $region1: #{tpu_custom_call.1} parent=0
    #allocation2 [shape = 'u8[8192]{0}', space=vmem, size = 0x2000, scoped, tag = 'input window, operand 0, single buffered']
    #allocation3 [shape = 's32[1]{0}', space=sflag, size = 0x4, scoped, tag = 'scoped memory for tpu_custom_call.1']
    #allocation4 [shape = 's32[1]{0}', space=sflag, size = 0x4, scoped, tag = 'scoped memory for tpu_custom_call.1']
    #allocation5 [shape = 'u8[65536]{0}', space=vmem, size = 0x10000, scoped, tag = 'input window, operand 1, single buffered']
    #allocation6 [shape = 's32[1]{0}', space=sflag, size = 0x4, scoped, tag = 'scoped memory for tpu_custom_call.1']
    #allocation7 [shape = 'u8[512]{0}', space=vmem, size = 0x400, scoped, tag = 'input window, operand 2, single buffered']
    #allocation8 [shape = 'u8[32768]{0}', space=vmem, size = 0x8000, scoped, tag = 'input window, operand 3, single buffered']
    #allocation9 [shape = 's32[1]{0}', space=sflag, size = 0x4, scoped, tag = 'scoped memory for tpu_custom_call.1']
    #allocation10 [shape = 'u8[512]{0}', space=vmem, size = 0x400, scoped, tag = 'input window, operand 4, single buffered']
    #allocation11 [shape = 'u8[32768]{0}', space=vmem, size = 0x8000, scoped, tag = 'input window, operand 5, single buffered']
    #allocation12 [shape = 's32[1]{0}', space=sflag, size = 0x4, scoped, tag = 'scoped memory for tpu_custom_call.1']
    #allocation13 [shape = 'u8[512]{0}', space=vmem, size = 0x400, scoped, tag = 'input window, operand 6, single buffered']
    #allocation14 [shape = 'u8[8192]{0}', space=vmem, size = 0x2000, scoped, tag = 'output window, operand 0, single buffered']
    %12 = vsyncpa [#allocation3], 0
    %13 = vsyncpa [#allocation6], 0
    %14 = vsyncpa [#allocation9], 0
    %15 = vsyncpa [#allocation12], 0
    %16 = vsyncpa [#allocation4], 0
    // Predicated region
    $region2: #{tpu_custom_call.1} parent=1 // pred_check
      _
    $region3: #{tpu_custom_call.1} parent=1 // pred_check_branch
      %18 = sbr.rel (0) target = $region5
    $region4: #{tpu_custom_call.1} parent=1 // pred_region
      %s20 = ssub.s32 256, 256
      %21 = vsyncadd [#allocation3], %s20
      %s22 = sshll.u32 [#allocation2], 4
      %s23 = int_to_ptr.vmem [resolvable:$true] %s22
      %28 = dma.hbm_to_vmem [thread:$0]  %s0, 256, %s23, [#allocation3], 128, 128, 8
    $region5: #{tpu_custom_call.1} parent=1 // pred_fallthru
      _
    // Predicated region
    $region6: #{tpu_custom_call.1} parent=1 // pred_check
      _
    $region7: #{tpu_custom_call.1} parent=1 // pred_check_branch
      %30 = sbr.rel (0) target = $region9
    $region8: #{tpu_custom_call.1} parent=1 // pred_region
      %s32 = ssub.s32 2048, 2048
      %33 = vsyncadd [#allocation6], %s32
      %s34 = sshll.u32 [#allocation5], 4
      %s35 = int_to_ptr.vmem [resolvable:$true] %s34
      %40 = dma.hbm_to_vmem [thread:$0]  %s1, 2048, %s35, [#allocation6], 64, 64, 4
    $region9: #{tpu_custom_call.1} parent=1 // pred_fallthru
      _
    // Predicated region
    $region10: #{tpu_custom_call.1} parent=1 // pred_check
      _
    $region11: #{tpu_custom_call.1} parent=1 // pred_check_branch
      %42 = sbr.rel (0) target = $region13
    $region12: #{tpu_custom_call.1} parent=1 // pred_region
      %s44 = ssub.s32 16, 16
      %45 = vsyncadd [#allocation6], %s44
      %s47 = sshll.u32 [#allocation7], 4
      %s48 = int_to_ptr.vmem [resolvable:$true] %s47
      %50 = dma.hbm_to_vmem [thread:$0]  %s2, 16, %s48, [#allocation6]
    $region13: #{tpu_custom_call.1} parent=1 // pred_fallthru
      _
    // Predicated region
    $region14: #{tpu_custom_call.1} parent=1 // pred_check
      _
    $region15: #{tpu_custom_call.1} parent=1 // pred_check_branch
      %52 = sbr.rel (0) target = $region17
    $region16: #{tpu_custom_call.1} parent=1 // pred_region
      %s54 = ssub.s32 1024, 1024
      %55 = vsyncadd [#allocation9], %s54
      %s56 = sshll.u32 [#allocation8], 4
      %s57 = int_to_ptr.vmem [resolvable:$true] %s56
      %62 = dma.hbm_to_vmem [thread:$0]  %s3, 1024, %s57, [#allocation9], 64, 64, 4
    $region17: #{tpu_custom_call.1} parent=1 // pred_fallthru
      _
    // Predicated region
    $region18: #{tpu_custom_call.1} parent=1 // pred_check
      _
    $region19: #{tpu_custom_call.1} parent=1 // pred_check_branch
      %64 = sbr.rel (0) target = $region21
    $region20: #{tpu_custom_call.1} parent=1 // pred_region
      %s66 = ssub.s32 16, 16
      %67 = vsyncadd [#allocation9], %s66
      %s69 = sshll.u32 [#allocation10], 4
      %s70 = int_to_ptr.vmem [resolvable:$true] %s69
      %72 = dma.hbm_to_vmem [thread:$0]  %s4, 16, %s70, [#allocation9]
    $region21: #{tpu_custom_call.1} parent=1 // pred_fallthru
      _
    // Predicated region
    $region22: #{tpu_custom_call.1} parent=1 // pred_check
      _
    $region23: #{tpu_custom_call.1} parent=1 // pred_check_branch
      %74 = sbr.rel (0) target = $region25
    $region24: #{tpu_custom_call.1} parent=1 // pred_region
      %s76 = ssub.s32 1024, 1024
      %77 = vsyncadd [#allocation12], %s76
      %s78 = sshll.u32 [#allocation11], 4
      %s79 = int_to_ptr.vmem [resolvable:$true] %s78
      %84 = dma.hbm_to_vmem [thread:$0]  %s5, 1024, %s79, [#allocation12], 64, 64, 4
    $region25: #{tpu_custom_call.1} parent=1 // pred_fallthru
      _
    // Predicated region
    $region26: #{tpu_custom_call.1} parent=1 // pred_check
      _
    $region27: #{tpu_custom_call.1} parent=1 // pred_check_branch
      %86 = sbr.rel (0) target = $region29
    $region28: #{tpu_custom_call.1} parent=1 // pred_region
      %s88 = ssub.s32 16, 16
      %89 = vsyncadd [#allocation12], %s88
      %s91 = sshll.u32 [#allocation13], 4
      %s92 = int_to_ptr.vmem [resolvable:$true] %s91
      %94 = dma.hbm_to_vmem [thread:$0]  %s6, 16, %s92, [#allocation12]
    $region29: #{tpu_custom_call.1} parent=1 // pred_fallthru
      _
    // Predicated region
    $region30: #{tpu_custom_call.1} parent=1 // pred_check
      _
    $region31: #{tpu_custom_call.1} parent=1 // pred_check_branch
      %96 = sbr.rel (0) target = $region33
    $region32: #{tpu_custom_call.1} parent=1 // pred_region
      %97 = dma.done [#allocation3], 256
    $region33: #{tpu_custom_call.1} parent=1 // pred_fallthru
      _
    // Predicated region
    $region34: #{tpu_custom_call.1} parent=1 // pred_check
      _
    $region35: #{tpu_custom_call.1} parent=1 // pred_check_branch
      %99 = sbr.rel (0) target = $region37
    $region36: #{tpu_custom_call.1} parent=1 // pred_region
      %100 = dma.done [#allocation6], 2048
    $region37: #{tpu_custom_call.1} parent=1 // pred_fallthru
      _
    // Predicated region
    $region38: #{tpu_custom_call.1} parent=1 // pred_check
      _
    $region39: #{tpu_custom_call.1} parent=1 // pred_check_branch
      %102 = sbr.rel (0) target = $region41
    $region40: #{tpu_custom_call.1} parent=1 // pred_region
      %103 = dma.done [#allocation6], 16
    $region41: #{tpu_custom_call.1} parent=1 // pred_fallthru
      _
    // Predicated region
    $region42: #{tpu_custom_call.1} parent=1 // pred_check
      _
    $region43: #{tpu_custom_call.1} parent=1 // pred_check_branch
      %105 = sbr.rel (0) target = $region45
    $region44: #{tpu_custom_call.1} parent=1 // pred_region
      %106 = dma.done [#allocation9], 1024
    $region45: #{tpu_custom_call.1} parent=1 // pred_fallthru
      _
    // Predicated region
    $region46: #{tpu_custom_call.1} parent=1 // pred_check
      _
    $region47: #{tpu_custom_call.1} parent=1 // pred_check_branch
      %108 = sbr.rel (0) target = $region49
    $region48: #{tpu_custom_call.1} parent=1 // pred_region
      %109 = dma.done [#allocation9], 16
    $region49: #{tpu_custom_call.1} parent=1 // pred_fallthru
      _
    // Predicated region
    $region50: #{tpu_custom_call.1} parent=1 // pred_check
      _
    $region51: #{tpu_custom_call.1} parent=1 // pred_check_branch
      %111 = sbr.rel (0) target = $region53
    $region52: #{tpu_custom_call.1} parent=1 // pred_region
      %112 = dma.done [#allocation12], 1024
    $region53: #{tpu_custom_call.1} parent=1 // pred_fallthru
      _
    // Predicated region
    $region54: #{tpu_custom_call.1} parent=1 // pred_check
      _
    $region55: #{tpu_custom_call.1} parent=1 // pred_check_branch
      %114 = sbr.rel (0) target = $region57
    $region56: #{tpu_custom_call.1} parent=1 // pred_region
      %115 = dma.done [#allocation12], 16
    $region57: #{tpu_custom_call.1} parent=1 // pred_fallthru
      _
    %v117 = vld [vmem:[#allocation2] sm:$0xff]
    %v118 = vld [vmem:[#allocation2 + $0x8] sm:$0xff]
    %v119 = vld [vmem:[#allocation5] sm:$0xf]
    %v120 = vld [vmem:[#allocation5 + $0x4] sm:$0xf]
    %v121 = vld [vmem:[#allocation5 + $0x8] sm:$0xf]
    %v122 = vld [vmem:[#allocation5 + $0xc] sm:$0xf]
    %v123 = vld [vmem:[#allocation5 + $0x10] sm:$0xf]
    %v124 = vld [vmem:[#allocation5 + $0x14] sm:$0xf]
    %v125 = vld [vmem:[#allocation5 + $0x18] sm:$0xf]
    %v126 = vld [vmem:[#allocation5 + $0x1c] sm:$0xf]
    %v127 = vld [vmem:[#allocation5 + $0x20] sm:$0xf]
    %v128 = vld [vmem:[#allocation5 + $0x24] sm:$0xf]
    %v129 = vld [vmem:[#allocation5 + $0x28] sm:$0xf]
    %v130 = vld [vmem:[#allocation5 + $0x2c] sm:$0xf]
    %v131 = vld [vmem:[#allocation5 + $0x30] sm:$0xf]
    %v132 = vld [vmem:[#allocation5 + $0x34] sm:$0xf]
    %v133 = vld [vmem:[#allocation5 + $0x38] sm:$0xf]
    %v134 = vld [vmem:[#allocation5 + $0x3c] sm:$0xf]
    %v135 = vld [vmem:[#allocation5 + $0x40] sm:$0xf]
    %v136 = vld [vmem:[#allocation5 + $0x44] sm:$0xf]
    %v137 = vld [vmem:[#allocation5 + $0x48] sm:$0xf]
    %v138 = vld [vmem:[#allocation5 + $0x4c] sm:$0xf]
    %v139 = vld [vmem:[#allocation5 + $0x50] sm:$0xf]
    %v140 = vld [vmem:[#allocation5 + $0x54] sm:$0xf]
    %v141 = vld [vmem:[#allocation5 + $0x58] sm:$0xf]
    %v142 = vld [vmem:[#allocation5 + $0x5c] sm:$0xf]
    %v143 = vld [vmem:[#allocation5 + $0x60] sm:$0xf]
    %v144 = vld [vmem:[#allocation5 + $0x64] sm:$0xf]
    %v145 = vld [vmem:[#allocation5 + $0x68] sm:$0xf]
    %v146 = vld [vmem:[#allocation5 + $0x6c] sm:$0xf]
    %v147 = vld [vmem:[#allocation5 + $0x70] sm:$0xf]
    %v148 = vld [vmem:[#allocation5 + $0x74] sm:$0xf]
    %v149 = vld [vmem:[#allocation5 + $0x78] sm:$0xf]
    %v150 = vld [vmem:[#allocation5 + $0x7c] sm:$0xf]
    %v151 = vld [vmem:[#allocation7] sm:$0x1]
    %v153 = vlaneseq
    %v154 = vshrl.u32 %v153, 7
    %v155 = vsub.s32 0, %v154
    %v156 = vrot.slane %v151, %v155
    %v160 = vunpack.c.l.b16 %v117
    %v161 = vunpack.c.h.b16 %v117
    %v162 = vunpack.c.l.b16 %v118
    %v163 = vunpack.c.h.b16 %v118
    %v164 = vpack.c.b16 %v162, %v160
    %v165 = vpack.c.b16 %v163, %v161
    %v200 = vunpack.c.l.b16 %v119
    %v201 = vunpack.c.l.b16 %v120
    %v202 = vunpack.c.l.b16 %v121
    %v203 = vunpack.c.l.b16 %v122
    %v204 = vunpack.c.l.b16 %v123
    %v205 = vunpack.c.l.b16 %v124
    %v206 = vunpack.c.l.b16 %v125
    %v207 = vunpack.c.l.b16 %v126
    %v208 = vunpack.c.l.b16 %v127
    %v209 = vunpack.c.l.b16 %v128
    %v210 = vunpack.c.l.b16 %v129
    %v211 = vunpack.c.l.b16 %v130
    %v212 = vunpack.c.l.b16 %v131
    %v213 = vunpack.c.l.b16 %v132
    %v214 = vunpack.c.l.b16 %v133
    %v215 = vunpack.c.l.b16 %v134
    %v216 = vunpack.c.l.b16 %v135
    %v217 = vunpack.c.l.b16 %v136
    %v218 = vunpack.c.l.b16 %v137
    %v219 = vunpack.c.l.b16 %v138
    %v220 = vunpack.c.l.b16 %v139
    %v221 = vunpack.c.l.b16 %v140
    %v222 = vunpack.c.l.b16 %v141
    %v223 = vunpack.c.l.b16 %v142
    %v224 = vunpack.c.l.b16 %v143
    %v225 = vunpack.c.l.b16 %v144
    %v226 = vunpack.c.l.b16 %v145
    %v227 = vunpack.c.l.b16 %v146
    %v228 = vunpack.c.l.b16 %v147
    %v229 = vunpack.c.l.b16 %v148
    %v230 = vunpack.c.l.b16 %v149
    %v231 = vunpack.c.l.b16 %v150
    %v232 = vpack.c.b16 %v201, %v200
    %v233 = vpack.c.b16 %v203, %v202
    %v234 = vpack.c.b16 %v205, %v204
    %v235 = vpack.c.b16 %v207, %v206
    %v236 = vpack.c.b16 %v209, %v208
    %v237 = vpack.c.b16 %v211, %v210
    %v238 = vpack.c.b16 %v213, %v212
    %v239 = vpack.c.b16 %v215, %v214
    %v240 = vpack.c.b16 %v217, %v216
    %v241 = vpack.c.b16 %v219, %v218
    %v242 = vpack.c.b16 %v221, %v220
    %v243 = vpack.c.b16 %v223, %v222
    %v244 = vpack.c.b16 %v225, %v224
    %v245 = vpack.c.b16 %v227, %v226
    %v246 = vpack.c.b16 %v229, %v228
    %v247 = vpack.c.b16 %v231, %v230
    %264 = vmatprep.subr.bf16.mxu0 0
    %265 = vmatpush1.bf16.msra.mxu0 %v232
    %266 = vmatprep.subr.bf16.mxu0 0
    %267 = vmatpush1.bf16.msra.mxu0 %v233
    %268 = vmatprep.subr.bf16.mxu0 0
    %269 = vmatpush1.bf16.msra.mxu0 %v234
    %270 = vmatprep.subr.bf16.mxu0 0
    %271 = vmatpush1.bf16.msra.mxu0 %v235
    %272 = vmatprep.subr.bf16.mxu0 0
    %273 = vmatpush1.bf16.msra.mxu0 %v236
    %274 = vmatprep.subr.bf16.mxu0 0
    %275 = vmatpush1.bf16.msra.mxu0 %v237
    %276 = vmatprep.subr.bf16.mxu0 0
    %277 = vmatpush1.bf16.msra.mxu0 %v238
    %278 = vmatprep.subr.bf16.mxu0 0
    %279 = vmatpush1.bf16.msra.mxu0 %v239
    %280 = vmatprep.subr.bf16.mxu0 0
    %281 = vmatpush1.bf16.msra.mxu0 %v240
    %282 = vmatprep.subr.bf16.mxu0 0
    %283 = vmatpush1.bf16.msra.mxu0 %v241
    %284 = vmatprep.subr.bf16.mxu0 0
    %285 = vmatpush1.bf16.msra.mxu0 %v242
    %286 = vmatprep.subr.bf16.mxu0 0
    %287 = vmatpush1.bf16.msra.mxu0 %v243
    %288 = vmatprep.subr.bf16.mxu0 0
    %289 = vmatpush1.bf16.msra.mxu0 %v244
    %290 = vmatprep.subr.bf16.mxu0 0
    %291 = vmatpush1.bf16.msra.mxu0 %v245
    %292 = vmatprep.subr.bf16.mxu0 0
    %293 = vmatpush1.bf16.msra.mxu0 %v246
    %294 = vmatprep.subr.bf16.mxu0 0
    %295 = vmatpush1.bf16.msra.mxu0 %v247
    %296 = vmatprep.mubr.bf16.mxu0 %v165
    %297 = vmatmul.mubr.bf16.gmra.mrb[0].mxu0 %v164
    %v298 = vpop.f32.mrb[0].mxu0
    %v299 = vadd.f32 %v156, %v298
    %v300 = vpop.f32.mrb[0].mxu0
    %v301 = vpop.f32.mrb[0].mxu0
    %v302 = vadd.f32 %v156, %v301
    %v303 = vpop.f32.mrb[0].mxu0
    %304 = vdwg.mxu0
    %v305 = vmax.f32 %v299, 0.0
    %v306 = vmax.f32 %v302, 0.0
    %v307 = vpack.c.bf16 %v306, %v305
    %v308 = vld [vmem:[#allocation8] sm:$0xf]
    %v309 = vld [vmem:[#allocation8 + $0x4] sm:$0xf]
    %v310 = vld [vmem:[#allocation8 + $0x8] sm:$0xf]
    %v311 = vld [vmem:[#allocation8 + $0xc] sm:$0xf]
    %v312 = vld [vmem:[#allocation8 + $0x10] sm:$0xf]
    %v313 = vld [vmem:[#allocation8 + $0x14] sm:$0xf]
    %v314 = vld [vmem:[#allocation8 + $0x18] sm:$0xf]
    %v315 = vld [vmem:[#allocation8 + $0x1c] sm:$0xf]
    %v316 = vld [vmem:[#allocation8 + $0x20] sm:$0xf]
    %v317 = vld [vmem:[#allocation8 + $0x24] sm:$0xf]
    %v318 = vld [vmem:[#allocation8 + $0x28] sm:$0xf]
    %v319 = vld [vmem:[#allocation8 + $0x2c] sm:$0xf]
    %v320 = vld [vmem:[#allocation8 + $0x30] sm:$0xf]
    %v321 = vld [vmem:[#allocation8 + $0x34] sm:$0xf]
    %v322 = vld [vmem:[#allocation8 + $0x38] sm:$0xf]
    %v323 = vld [vmem:[#allocation8 + $0x3c] sm:$0xf]
    %v324 = vld [vmem:[#allocation10] sm:$0x1]
    %v326 = vlaneseq
    %v327 = vshrl.u32 %v326, 7
    %v328 = vsub.s32 0, %v327
    %v329 = vrot.slane %v324, %v328
    %v347 = vunpack.c.l.b16 %v308
    %v348 = vunpack.c.l.b16 %v309
    %v349 = vunpack.c.l.b16 %v310
    %v350 = vunpack.c.l.b16 %v311
    %v351 = vunpack.c.l.b16 %v312
    %v352 = vunpack.c.l.b16 %v313
    %v353 = vunpack.c.l.b16 %v314
    %v354 = vunpack.c.l.b16 %v315
    %v355 = vunpack.c.l.b16 %v316
    %v356 = vunpack.c.l.b16 %v317
    %v357 = vunpack.c.l.b16 %v318
    %v358 = vunpack.c.l.b16 %v319
    %v359 = vunpack.c.l.b16 %v320
    %v360 = vunpack.c.l.b16 %v321
    %v361 = vunpack.c.l.b16 %v322
    %v362 = vunpack.c.l.b16 %v323
    %v363 = vpack.c.b16 %v348, %v347
    %v364 = vpack.c.b16 %v350, %v349
    %v365 = vpack.c.b16 %v352, %v351
    %v366 = vpack.c.b16 %v354, %v353
    %v367 = vpack.c.b16 %v356, %v355
    %v368 = vpack.c.b16 %v358, %v357
    %v369 = vpack.c.b16 %v360, %v359
    %v370 = vpack.c.b16 %v362, %v361
    %379 = vmatprep.subr.bf16.mxu0 0
    %380 = vmatpush1.bf16.msra.mxu0 %v363
    %381 = vmatprep.subr.bf16.mxu0 0
    %382 = vmatpush1.bf16.msra.mxu0 %v364
    %383 = vmatprep.subr.bf16.mxu0 0
    %384 = vmatpush1.bf16.msra.mxu0 %v365
    %385 = vmatprep.subr.bf16.mxu0 0
    %386 = vmatpush1.bf16.msra.mxu0 %v366
    %387 = vmatprep.subr.bf16.mxu0 0
    %388 = vmatpush1.bf16.msra.mxu0 %v367
    %389 = vmatprep.subr.bf16.mxu0 0
    %390 = vmatpush1.bf16.msra.mxu0 %v368
    %391 = vmatprep.subr.bf16.mxu0 0
    %392 = vmatpush1.bf16.msra.mxu0 %v369
    %393 = vmatprep.subr.bf16.mxu0 0
    %394 = vmatpush1.bf16.msra.mxu0 %v370
    %395 = vmatprep.subr.bf16.mxu0 0
    %396 = vmatpush1.bf16.msra.mxu0 0
    %397 = vmatprep.subr.bf16.mxu0 0
    %398 = vmatpush1.bf16.msra.mxu0 0
    %399 = vmatprep.subr.bf16.mxu0 0
    %400 = vmatpush1.bf16.msra.mxu0 0
    %401 = vmatprep.subr.bf16.mxu0 0
    %402 = vmatpush1.bf16.msra.mxu0 0
    %403 = vmatprep.subr.bf16.mxu0 0
    %404 = vmatpush1.bf16.msra.mxu0 0
    %405 = vmatprep.subr.bf16.mxu0 0
    %406 = vmatpush1.bf16.msra.mxu0 0
    %407 = vmatprep.subr.bf16.mxu0 0
    %408 = vmatpush1.bf16.msra.mxu0 0
    %409 = vmatprep.subr.bf16.mxu0 0
    %410 = vmatpush1.bf16.msra.mxu0 0
    %411 = vmatprep.mubr.bf16.mxu0 0
    %412 = vmatmul.mubr.bf16.gmra.mrb[0].mxu0 %v307
    %v413 = vpop.f32.mrb[0].mxu0
    %v414 = vadd.f32 %v329, %v413
    %v415 = vpop.f32.mrb[0].mxu0
    %v416 = vpop.f32.mrb[0].mxu0
    %v417 = vadd.f32 %v329, %v416
    %v418 = vpop.f32.mrb[0].mxu0
    %419 = vdwg.mxu0
    %v420 = vmax.f32 %v414, 0.0
    %v421 = vmax.f32 %v417, 0.0
    %v422 = vpack.c.bf16 %v421, %v420
    %v423 = vld [vmem:[#allocation11] sm:$0xf]
    %v424 = vld [vmem:[#allocation11 + $0x4] sm:$0xf]
    %v425 = vld [vmem:[#allocation11 + $0x8] sm:$0xf]
    %v426 = vld [vmem:[#allocation11 + $0xc] sm:$0xf]
    %v427 = vld [vmem:[#allocation11 + $0x10] sm:$0xf]
    %v428 = vld [vmem:[#allocation11 + $0x14] sm:$0xf]
    %v429 = vld [vmem:[#allocation11 + $0x18] sm:$0xf]
    %v430 = vld [vmem:[#allocation11 + $0x1c] sm:$0xf]
    %v431 = vld [vmem:[#allocation11 + $0x20] sm:$0xf]
    %v432 = vld [vmem:[#allocation11 + $0x24] sm:$0xf]
    %v433 = vld [vmem:[#allocation11 + $0x28] sm:$0xf]
    %v434 = vld [vmem:[#allocation11 + $0x2c] sm:$0xf]
    %v435 = vld [vmem:[#allocation11 + $0x30] sm:$0xf]
    %v436 = vld [vmem:[#allocation11 + $0x34] sm:$0xf]
    %v437 = vld [vmem:[#allocation11 + $0x38] sm:$0xf]
    %v438 = vld [vmem:[#allocation11 + $0x3c] sm:$0xf]
    %v439 = vld [vmem:[#allocation13] sm:$0x1]
    %v441 = vlaneseq
    %v442 = vshrl.u32 %v441, 7
    %v443 = vsub.s32 0, %v442
    %v444 = vrot.slane %v439, %v443
    %v462 = vunpack.c.l.b16 %v423
    %v463 = vunpack.c.l.b16 %v424
    %v464 = vunpack.c.l.b16 %v425
    %v465 = vunpack.c.l.b16 %v426
    %v466 = vunpack.c.l.b16 %v427
    %v467 = vunpack.c.l.b16 %v428
    %v468 = vunpack.c.l.b16 %v429
    %v469 = vunpack.c.l.b16 %v430
    %v470 = vunpack.c.l.b16 %v431
    %v471 = vunpack.c.l.b16 %v432
    %v472 = vunpack.c.l.b16 %v433
    %v473 = vunpack.c.l.b16 %v434
    %v474 = vunpack.c.l.b16 %v435
    %v475 = vunpack.c.l.b16 %v436
    %v476 = vunpack.c.l.b16 %v437
    %v477 = vunpack.c.l.b16 %v438
    %v478 = vpack.c.b16 %v463, %v462
    %v479 = vpack.c.b16 %v465, %v464
    %v480 = vpack.c.b16 %v467, %v466
    %v481 = vpack.c.b16 %v469, %v468
    %v482 = vpack.c.b16 %v471, %v470
    %v483 = vpack.c.b16 %v473, %v472
    %v484 = vpack.c.b16 %v475, %v474
    %v485 = vpack.c.b16 %v477, %v476
    %494 = vmatprep.subr.bf16.mxu0 0
    %495 = vmatpush1.bf16.msra.mxu0 %v478
    %496 = vmatprep.subr.bf16.mxu0 0
    %497 = vmatpush1.bf16.msra.mxu0 %v479
    %498 = vmatprep.subr.bf16.mxu0 0
    %499 = vmatpush1.bf16.msra.mxu0 %v480
    %500 = vmatprep.subr.bf16.mxu0 0
    %501 = vmatpush1.bf16.msra.mxu0 %v481
    %502 = vmatprep.subr.bf16.mxu0 0
    %503 = vmatpush1.bf16.msra.mxu0 %v482
    %504 = vmatprep.subr.bf16.mxu0 0
    %505 = vmatpush1.bf16.msra.mxu0 %v483
    %506 = vmatprep.subr.bf16.mxu0 0
    %507 = vmatpush1.bf16.msra.mxu0 %v484
    %508 = vmatprep.subr.bf16.mxu0 0
    %509 = vmatpush1.bf16.msra.mxu0 %v485
    %510 = vmatprep.subr.bf16.mxu0 0
    %511 = vmatpush1.bf16.msra.mxu0 0
    %512 = vmatprep.subr.bf16.mxu0 0
    %513 = vmatpush1.bf16.msra.mxu0 0
    %514 = vmatprep.subr.bf16.mxu0 0
    %515 = vmatpush1.bf16.msra.mxu0 0
    %516 = vmatprep.subr.bf16.mxu0 0
    %517 = vmatpush1.bf16.msra.mxu0 0
    %518 = vmatprep.subr.bf16.mxu0 0
    %519 = vmatpush1.bf16.msra.mxu0 0
    %520 = vmatprep.subr.bf16.mxu0 0
    %521 = vmatpush1.bf16.msra.mxu0 0
    %522 = vmatprep.subr.bf16.mxu0 0
    %523 = vmatpush1.bf16.msra.mxu0 0
    %524 = vmatprep.subr.bf16.mxu0 0
    %525 = vmatpush1.bf16.msra.mxu0 0
    %526 = vmatprep.mubr.bf16.mxu0 0
    %527 = vmatmul.mubr.bf16.gmra.mrb[0].mxu0 %v422
    %v528 = vpop.f32.mrb[0].mxu0
    %v529 = vadd.f32 %v444, %v528
    %v530 = vpop.f32.mrb[0].mxu0
    %v531 = vpop.f32.mrb[0].mxu0
    %v532 = vadd.f32 %v444, %v531
    %v533 = vpop.f32.mrb[0].mxu0
    %534 = vdwg.mxu0
    %535 = vst [vmem:[#allocation14] sm:$0xff] %v529
    %536 = vst [vmem:[#allocation14 + $0x8] sm:$0xff] %v532
    // Predicated region
    $region58: #{tpu_custom_call.1} parent=1 // pred_check
      _
    $region59: #{tpu_custom_call.1} parent=1 // pred_check_branch
      %538 = sbr.rel (0) target = $region61
    $region60: #{tpu_custom_call.1} parent=1 // pred_region
      %s540 = ssub.s32 256, 256
      %541 = vsyncadd [#allocation4], %s540
      %s542 = sshll.u32 [#allocation14], 4
      %s543 = int_to_ptr.vmem [resolvable:$true] %s542
      %548 = dma.vmem_to_hbm [thread:$0]  %s543, 256, %s7, [#allocation4], 128, 128, 8
    $region61: #{tpu_custom_call.1} parent=1 // pred_fallthru
      _
    // Predicated region
    $region62: #{tpu_custom_call.1} parent=1 // pred_check
      _
    $region63: #{tpu_custom_call.1} parent=1 // pred_check_branch
      %550 = sbr.rel (0) target = $region65
    $region64: #{tpu_custom_call.1} parent=1 // pred_region
      %551 = dma.done [#allocation4], 256
    $region65: #{tpu_custom_call.1} parent=1 // pred_fallthru
      _
    %552 = vsyncpa [#allocation3], 1
    %553 = vsyncpa [#allocation6], 1
    %554 = vsyncpa [#allocation9], 1
    %555 = vsyncpa [#allocation12], 1
    %556 = vsyncpa [#allocation4], 1

</llo_original>
